<compile_context>
chip_gen: v7x
topology: tpu7x:2x2x1
jax: 0.10.0
libtpu: 0.0.40
codegen_flags: <defaults>
</compile_context>

<pallas_src>
import jax
import jax.numpy as jnp
from jax.experimental import pallas as pl
from jax.experimental.pallas import tpu as pltpu

_LANES = 128


def _mlp_sigmoid_kernel(w1_ref, b1_ref, w2_ref, b2_ref, x_ref, o_ref):
    """Fused (BN-folded) Linear1 -> sigmoid -> Linear2 in a lane-dense layout.

    x_ref : (in_features, TQ, 128)  VMEM, batch on (sublane, lane)
    o_ref : (out_features, TQ, 128) VMEM
    w1_ref: (in_features*n_hidden,) SMEM   [k * n_hidden + h]
    b1_ref: (n_hidden,)             SMEM
    w2_ref: (n_hidden*out_features,) SMEM  [h * out_features + o]
    b2_ref: (out_features,)         SMEM
    """
    in_features = x_ref.shape[0]
    n_hidden = b1_ref.shape[0]
    out_features = o_ref.shape[0]

    # Dense (TQ, 128) f32 tiles per input feature.
    x = [x_ref[k].astype(jnp.float32) for k in range(in_features)]

    acc = [None] * out_features
    for h in range(n_hidden):
        # Linear1 (BN already folded in): in_features broadcast FMAs per hidden unit.
        z = x[0] * w1_ref[0 * n_hidden + h]
        for k in range(1, in_features):
            z = z + x[k] * w1_ref[k * n_hidden + h]
        z = z + b1_ref[h]

        # Sigmoid: exp on the EUP; exact reciprocal keeps <=1e-5 accuracy
        # (approx=True would push the divide fully onto the EUP at lower precision).
        p = pl.reciprocal(1.0 + jnp.exp(-z), approx=False)

        # Linear2: scalar-broadcast multiply-accumulate (no MXU, no lane reduce).
        for o in range(out_features):
            t = p * w2_ref[h * out_features + o]
            acc[o] = t if acc[o] is None else acc[o] + t

    for o in range(out_features):
        o_ref[o] = (acc[o] + b2_ref[o]).astype(o_ref.dtype)


def _round_up(a, m):
    return ((a + m - 1) // m) * m


def _choose_q_tiling(q, tq_cap=8192):
    """Pick the batch-quotient tile (rows of 128 batch elements) and padded extent."""
    if q <= 16:                              # tiny batch: single step, tq == full dim
        return q, q
    # >= 8 grid steps so the pipeline and megacore sharding have work to overlap;
    # tq multiple of 8 (sublane tiling), padding bounded by a few quotient rows.
    n_steps = max(pl.cdiv(q, tq_cap), 8)
    tq = _round_up(pl.cdiv(q, n_steps), 8)
    return tq, _round_up(q, tq)


def sigmoid_class1_norm1_forward(x, w1, b1, gamma, beta, running_mean, running_var,
                                 w2, b2, *, eps=1e-5):
    """x: (B, in);  w1: (in, hidden); b1: (hidden,);
    gamma/beta/running_mean/running_var: (hidden,);
    w2: (hidden, out); b2: (out,).  Returns (B, out)."""
    B, in_features = x.shape
    n_hidden = w1.shape[1]
    out_features = w2.shape[1]
    out_dtype = x.dtype

    # ---- fold inference-mode BatchNorm1d into Linear1 (host side) -----------
    scale = (gamma.astype(jnp.float32)
             * jax.lax.rsqrt(running_var.astype(jnp.float32) + eps))          # (hidden,)
    w1_eff = w1.astype(jnp.float32) * scale[None, :]                          # (in, hidden)
    b1_eff = ((b1.astype(jnp.float32) - running_mean.astype(jnp.float32)) * scale
              + beta.astype(jnp.float32))                                     # (hidden,)

    # Tiny parameters -> flat f32 scalars resident in SMEM.
    w1_flat = w1_eff.reshape(-1)                    # [k * n_hidden + h]
    b1_flat = b1_eff.reshape(-1)
    w2_flat = w2.astype(jnp.float32).reshape(-1)    # [h * out_features + o]
    b2_flat = b2.astype(jnp.float32).reshape(-1)

    # ---- lane-dense layout: batch on (sublane, lane) -------------------------
    bp = _round_up(B, _LANES)
    q = bp // _LANES
    tq, q_pad = _choose_q_tiling(q)
    bpp = q_pad * _LANES

    xt = x if bpp == B else jnp.pad(x, ((0, bpp - B), (0, 0)))
    # Single transpose copy of x (ideally the producer would emit x already
    # transposed); the (B,1) <-> (B/128,128) output reshape below is free.
    xt = xt.T.reshape(in_features, q_pad, _LANES)

    grid = (q_pad // tq,)

    # VMEM budget from the *padded* tile footprint (sublane pad to 8), x2 for the
    # double-buffered pipeline, plus headroom; capped so it fits every generation
    # (v7x: 64 MiB physical / 32 MiB scoped default).
    tq8 = _round_up(tq, 8)
    blk_bytes = (in_features * tq8 * _LANES * xt.dtype.itemsize
                 + out_features * tq8 * _LANES * jnp.dtype(out_dtype).itemsize)
    vmem_limit = int(min(48 * 1024 * 1024,
                         max(4 * 1024 * 1024, 2 * blk_bytes + 512 * 1024)))

    smem = pl.BlockSpec(memory_space=pltpu.MemorySpace.SMEM)

    out_t = pl.pallas_call(
        _mlp_sigmoid_kernel,
        out_shape=jax.ShapeDtypeStruct((out_features, q_pad, _LANES), out_dtype),
        grid=grid,
        in_specs=[
            smem,                                                       # w1_eff (flat)
            smem,                                                       # b1_eff (flat)
            smem,                                                       # w2     (flat)
            smem,                                                       # b2     (flat)
            pl.BlockSpec((in_features, tq, _LANES), lambda i: (0, i, 0)),  # x tile
        ],
        out_specs=pl.BlockSpec((out_features, tq, _LANES), lambda i: (0, i, 0)),
        compiler_params=pltpu.CompilerParams(
            dimension_semantics=("parallel",),
            vmem_limit_bytes=vmem_limit,
        ),
    )(w1_flat, b1_flat, w2_flat, b2_flat, xt)

    out = out_t.reshape(out_features, bpp)[:, :B]
    # out_features == 1 (the module's config): this transpose is a free reshape.
    return jnp.transpose(out).astype(out_dtype)


if __name__ == "__main__":
    in_features, n_hidden, out_features = 2, 4, 1
    batch = 8
    eps = 1e-5

    key = jax.random.PRNGKey(0)
    kx, k1, k2, k3, k4, k5, k6, k7, k8 = jax.random.split(key, 9)

    x = jax.random.normal(kx, (batch, in_features), dtype=jnp.float32)

    # nn.Linear-style init: U(-1/sqrt(fan_in), +1/sqrt(fan_in)); weights stored
    # as (in, out) == transpose of torch's (out, in).
    bound1 = in_features ** -0.5
    bound2 = n_hidden ** -0.5
    w1 = jax.random.uniform(k1, (in_features, n_hidden), jnp.float32, -bound1, bound1)
    b1 = jax.random.uniform(k2, (n_hidden,), jnp.float32, -bound1, bound1)
    w2 = jax.random.uniform(k3, (n_hidden, out_features), jnp.float32, -bound2, bound2)
    b2 = jax.random.uniform(k4, (out_features,), jnp.float32, -bound2, bound2)

    # BatchNorm1d affine params + running statistics (inference mode).
    gamma = 1.0 + 0.1 * jax.random.normal(k5, (n_hidden,), jnp.float32)
    beta = 0.1 * jax.random.normal(k6, (n_hidden,), jnp.float32)
    running_mean = 0.1 * jax.random.normal(k7, (n_hidden,), jnp.float32)
    running_var = jnp.abs(1.0 + 0.1 * jax.random.normal(k8, (n_hidden,), jnp.float32))

    out = sigmoid_class1_norm1_forward(x, w1, b1, gamma, beta, running_mean,
                                       running_var, w2, b2, eps=eps)
    out = jax.block_until_ready(out)

    # pure-JAX reference
    z1 = x @ w1 + b1
    z1 = (z1 - running_mean) / jnp.sqrt(running_var + eps) * gamma + beta
    p1 = 1.0 / (1.0 + jnp.exp(-z1))
    ref = p1 @ w2 + b2

    assert out.shape == (batch, out_features)
    err = float(jnp.max(jnp.abs(out - ref)))
    assert jnp.allclose(out, ref, atol=1e-5, rtol=1e-5), err
    print("KERNEL_OK")
</pallas_src>

<mosaic_0001>
module attributes {stable_mosaic.version = 11 : i64} {
  func.func @_mlp_sigmoid_kernel(%arg0: i32, %arg1: memref<8xf32, #tpu.memory_space<smem>>, %arg2: memref<4xf32, #tpu.memory_space<smem>>, %arg3: memref<4xf32, #tpu.memory_space<smem>>, %arg4: memref<1xf32, #tpu.memory_space<smem>>, %arg5: memref<2x1x128xf32, #tpu.memory_space<vmem>>, %arg6: memref<1x1x128xf32, #tpu.memory_space<vmem>>) attributes {dimension_semantics = [#tpu.dimension_semantics<parallel>], iteration_bounds = array<i64: 1>, scalar_prefetch = 0 : i64, scratch_operands = 0 : i64, tpu.core_type = #tpu.core_type<tc>, window_params = [{transform_indices = @transform_0, window_bounds = array<i64: 8>}, {transform_indices = @transform_1, window_bounds = array<i64: 4>}, {transform_indices = @transform_2, window_bounds = array<i64: 4>}, {transform_indices = @transform_3, window_bounds = array<i64: 1>}, {transform_indices = @transform_4, window_bounds = array<i64: 2, 1, 128>}, {transform_indices = @transform_5, window_bounds = array<i64: 1, 1, 128>}]} {
    %c0 = arith.constant 0 : index
    %c0_0 = arith.constant 0 : index
    %c0_1 = arith.constant 0 : index
    %0 = vector.load %arg5[%c0, %c0_0, %c0_1] : memref<2x1x128xf32, #tpu.memory_space<vmem>>, vector<1x1x128xf32>
    %1 = vector.shape_cast %0 : vector<1x1x128xf32> to vector<1x128xf32>
    %c1 = arith.constant 1 : index
    %c0_2 = arith.constant 0 : index
    %c0_3 = arith.constant 0 : index
    %2 = vector.load %arg5[%c1, %c0_2, %c0_3] : memref<2x1x128xf32, #tpu.memory_space<vmem>>, vector<1x1x128xf32>
    %3 = vector.shape_cast %2 : vector<1x1x128xf32> to vector<1x128xf32>
    %c0_4 = arith.constant 0 : index
    %4 = memref.load %arg1[%c0_4] : memref<8xf32, #tpu.memory_space<smem>>
    %5 = vector.broadcast %4 : f32 to vector<1x128xf32>
    %6 = arith.mulf %1, %5 : vector<1x128xf32>
    %c4 = arith.constant 4 : index
    %7 = memref.load %arg1[%c4] : memref<8xf32, #tpu.memory_space<smem>>
    %8 = vector.broadcast %7 : f32 to vector<1x128xf32>
    %9 = arith.mulf %3, %8 : vector<1x128xf32>
    %10 = arith.addf %6, %9 : vector<1x128xf32>
    %c0_5 = arith.constant 0 : index
    %11 = memref.load %arg2[%c0_5] : memref<4xf32, #tpu.memory_space<smem>>
    %12 = vector.broadcast %11 : f32 to vector<1x128xf32>
    %13 = arith.addf %10, %12 : vector<1x128xf32>
    %cst = arith.constant 0.000000e+00 : f32
    %14 = vector.broadcast %cst : f32 to vector<1x128xf32>
    %15 = arith.subf %14, %13 : vector<1x128xf32>
    %16 = math.exp %15 : vector<1x128xf32>
    %cst_6 = arith.constant 1.000000e+00 : f32
    %17 = vector.broadcast %cst_6 : f32 to vector<1x128xf32>
    %18 = arith.addf %17, %16 : vector<1x128xf32>
    %19 = tpu.reciprocal %18 : vector<1x128xf32> -> vector<1x128xf32>
    %c0_7 = arith.constant 0 : index
    %20 = memref.load %arg3[%c0_7] : memref<4xf32, #tpu.memory_space<smem>>
    %21 = vector.broadcast %20 : f32 to vector<1x128xf32>
    %22 = arith.mulf %19, %21 : vector<1x128xf32>
    %c1_8 = arith.constant 1 : index
    %23 = memref.load %arg1[%c1_8] : memref<8xf32, #tpu.memory_space<smem>>
    %24 = vector.broadcast %23 : f32 to vector<1x128xf32>
    %25 = arith.mulf %1, %24 : vector<1x128xf32>
    %c5 = arith.constant 5 : index
    %26 = memref.load %arg1[%c5] : memref<8xf32, #tpu.memory_space<smem>>
    %27 = vector.broadcast %26 : f32 to vector<1x128xf32>
    %28 = arith.mulf %3, %27 : vector<1x128xf32>
    %29 = arith.addf %25, %28 : vector<1x128xf32>
    %c1_9 = arith.constant 1 : index
    %30 = memref.load %arg2[%c1_9] : memref<4xf32, #tpu.memory_space<smem>>
    %31 = vector.broadcast %30 : f32 to vector<1x128xf32>
    %32 = arith.addf %29, %31 : vector<1x128xf32>
    %cst_10 = arith.constant 0.000000e+00 : f32
    %33 = vector.broadcast %cst_10 : f32 to vector<1x128xf32>
    %34 = arith.subf %33, %32 : vector<1x128xf32>
    %35 = math.exp %34 : vector<1x128xf32>
    %cst_11 = arith.constant 1.000000e+00 : f32
    %36 = vector.broadcast %cst_11 : f32 to vector<1x128xf32>
    %37 = arith.addf %36, %35 : vector<1x128xf32>
    %38 = tpu.reciprocal %37 : vector<1x128xf32> -> vector<1x128xf32>
    %c1_12 = arith.constant 1 : index
    %39 = memref.load %arg3[%c1_12] : memref<4xf32, #tpu.memory_space<smem>>
    %40 = vector.broadcast %39 : f32 to vector<1x128xf32>
    %41 = arith.mulf %38, %40 : vector<1x128xf32>
    %42 = arith.addf %22, %41 : vector<1x128xf32>
    %c2 = arith.constant 2 : index
    %43 = memref.load %arg1[%c2] : memref<8xf32, #tpu.memory_space<smem>>
    %44 = vector.broadcast %43 : f32 to vector<1x128xf32>
    %45 = arith.mulf %1, %44 : vector<1x128xf32>
    %c6 = arith.constant 6 : index
    %46 = memref.load %arg1[%c6] : memref<8xf32, #tpu.memory_space<smem>>
    %47 = vector.broadcast %46 : f32 to vector<1x128xf32>
    %48 = arith.mulf %3, %47 : vector<1x128xf32>
    %49 = arith.addf %45, %48 : vector<1x128xf32>
    %c2_13 = arith.constant 2 : index
    %50 = memref.load %arg2[%c2_13] : memref<4xf32, #tpu.memory_space<smem>>
    %51 = vector.broadcast %50 : f32 to vector<1x128xf32>
    %52 = arith.addf %49, %51 : vector<1x128xf32>
    %cst_14 = arith.constant 0.000000e+00 : f32
    %53 = vector.broadcast %cst_14 : f32 to vector<1x128xf32>
    %54 = arith.subf %53, %52 : vector<1x128xf32>
    %55 = math.exp %54 : vector<1x128xf32>
    %cst_15 = arith.constant 1.000000e+00 : f32
    %56 = vector.broadcast %cst_15 : f32 to vector<1x128xf32>
    %57 = arith.addf %56, %55 : vector<1x128xf32>
    %58 = tpu.reciprocal %57 : vector<1x128xf32> -> vector<1x128xf32>
    %c2_16 = arith.constant 2 : index
    %59 = memref.load %arg3[%c2_16] : memref<4xf32, #tpu.memory_space<smem>>
    %60 = vector.broadcast %59 : f32 to vector<1x128xf32>
    %61 = arith.mulf %58, %60 : vector<1x128xf32>
    %62 = arith.addf %42, %61 : vector<1x128xf32>
    %c3 = arith.constant 3 : index
    %63 = memref.load %arg1[%c3] : memref<8xf32, #tpu.memory_space<smem>>
    %64 = vector.broadcast %63 : f32 to vector<1x128xf32>
    %65 = arith.mulf %1, %64 : vector<1x128xf32>
    %c7 = arith.constant 7 : index
    %66 = memref.load %arg1[%c7] : memref<8xf32, #tpu.memory_space<smem>>
    %67 = vector.broadcast %66 : f32 to vector<1x128xf32>
    %68 = arith.mulf %3, %67 : vector<1x128xf32>
    %69 = arith.addf %65, %68 : vector<1x128xf32>
    %c3_17 = arith.constant 3 : index
    %70 = memref.load %arg2[%c3_17] : memref<4xf32, #tpu.memory_space<smem>>
    %71 = vector.broadcast %70 : f32 to vector<1x128xf32>
    %72 = arith.addf %69, %71 : vector<1x128xf32>
    %cst_18 = arith.constant 0.000000e+00 : f32
    %73 = vector.broadcast %cst_18 : f32 to vector<1x128xf32>
    %74 = arith.subf %73, %72 : vector<1x128xf32>
    %75 = math.exp %74 : vector<1x128xf32>
    %cst_19 = arith.constant 1.000000e+00 : f32
    %76 = vector.broadcast %cst_19 : f32 to vector<1x128xf32>
    %77 = arith.addf %76, %75 : vector<1x128xf32>
    %78 = tpu.reciprocal %77 : vector<1x128xf32> -> vector<1x128xf32>
    %c3_20 = arith.constant 3 : index
    %79 = memref.load %arg3[%c3_20] : memref<4xf32, #tpu.memory_space<smem>>
    %80 = vector.broadcast %79 : f32 to vector<1x128xf32>
    %81 = arith.mulf %78, %80 : vector<1x128xf32>
    %82 = arith.addf %62, %81 : vector<1x128xf32>
    %c0_21 = arith.constant 0 : index
    %83 = memref.load %arg4[%c0_21] : memref<1xf32, #tpu.memory_space<smem>>
    %84 = vector.broadcast %83 : f32 to vector<1x128xf32>
    %85 = arith.addf %82, %84 : vector<1x128xf32>
    %c0_22 = arith.constant 0 : index
    %c0_23 = arith.constant 0 : index
    %c0_24 = arith.constant 0 : index
    %86 = vector.load %arg6[%c0_22, %c0_23, %c0_24] : memref<1x1x128xf32, #tpu.memory_space<vmem>>, vector<1x1x128xf32>
    %87 = vector.shape_cast %86 : vector<1x1x128xf32> to vector<1x128xf32>
    %88 = vector.shape_cast %85 : vector<1x128xf32> to vector<1x1x128xf32>
    tpu.vector_store %arg6[%c0_22, %c0_23, %c0_24], %88 {strides = array<i32>} : memref<1x1x128xf32, #tpu.memory_space<vmem>>, vector<1x1x128xf32>,
    return
  }
  func.func @transform_0(%arg0: i32) -> i32 {
    %c0_i32 = arith.constant 0 : i32
    %c0_i32_0 = arith.constant 0 : i32
    return %c0_i32 : i32
  }
  func.func @transform_1(%arg0: i32) -> i32 {
    %c0_i32 = arith.constant 0 : i32
    %c0_i32_0 = arith.constant 0 : i32
    return %c0_i32 : i32
  }
  func.func @transform_2(%arg0: i32) -> i32 {
    %c0_i32 = arith.constant 0 : i32
    %c0_i32_0 = arith.constant 0 : i32
    return %c0_i32 : i32
  }
  func.func @transform_3(%arg0: i32) -> i32 {
    %c0_i32 = arith.constant 0 : i32
    %c0_i32_0 = arith.constant 0 : i32
    return %c0_i32 : i32
  }
  func.func @transform_4(%arg0: i32) -> (i32, i32, i32) {
    %c0_i32 = arith.constant 0 : i32
    %c0_i32_0 = arith.constant 0 : i32
    %c0_i32_1 = arith.constant 0 : i32
    return %c0_i32, %arg0, %c0_i32_0 : i32, i32, i32
  }
  func.func @transform_5(%arg0: i32) -> (i32, i32, i32) {
    %c0_i32 = arith.constant 0 : i32
    %c0_i32_0 = arith.constant 0 : i32
    %c0_i32_1 = arith.constant 0 : i32
    return %c0_i32, %arg0, %c0_i32_0 : i32, i32, i32
  }
}

</mosaic_0001>

<llo_original>
// kernel: tpu_custom_call.1
$region0: #{tpu_custom_call.1}
  #allocation0 [shape = 'u32[]', space=smem, size = 0x4, offset = 0x4, fixed_abs, tag = 'smem constant byte address 0x4 - core index']
  #allocation1 [shape = 'u32[144,128]{1,0:T(1,128)}', space=vmem, size = 0x12000, scoped, tag = 'internal scratch']
  #allocation2 [shape = 'f32[1]{0:T(128)S(6)}', space=smem, size = 0x200, scoped, tag = 'scoped memory for tpu_custom_call.1']
  %s0 = inlined_call_operand.vmem [shape: f32[8], index: 0, kind: input, shape index: {}]
  %s1 = inlined_call_operand.vmem [shape: f32[4], index: 1, kind: input, shape index: {}]
  %s2 = inlined_call_operand.vmem [shape: f32[4], index: 2, kind: input, shape index: {}]
  %s3 = inlined_call_operand.<no memory space> [shape: f32[1], index: 3, kind: input, shape index: {}]
  %s4 = inlined_call_operand.vmem [shape: f32[2,1,128], index: 4, kind: input, shape index: {}]
  %s5 = inlined_call_operand.hbm [shape: f32[1,1,128], index: 5, kind: output, shape index: {}]
  %s6 = sld [smem:[#allocation0]]
  $region42: #{tpu_custom_call.1} parent=0
    _
  %s8 = ssub.s32 1, %s6
  %s9 = scalar_select 0, %s8, %s6
  %10 = sst [smem:[#allocation2]] %s3
  $region1: #{tpu_custom_call.1} parent=0
    #allocation3 [shape = 'u8[512]{0}', space=smem, size = 0x200, scoped, tag = 'input window, operand 0, single buffered']
    #allocation4 [shape = 's32[1]{0}', space=sflag, size = 0x4, scoped, tag = 'scoped memory for tpu_custom_call.1']
    #allocation5 [shape = 's32[1]{0}', space=sflag, size = 0x4, scoped, tag = 'scoped memory for tpu_custom_call.1']
    #allocation6 [shape = 'u8[512]{0}', space=smem, size = 0x200, scoped, tag = 'input window, operand 1, single buffered']
    #allocation7 [shape = 's32[1]{0}', space=sflag, size = 0x4, scoped, tag = 'scoped memory for tpu_custom_call.1']
    #allocation8 [shape = 'u8[512]{0}', space=smem, size = 0x200, scoped, tag = 'input window, operand 2, single buffered']
    #allocation9 [shape = 'u8[512]{0}', space=vmem, size = 0x400, scoped, tag = 'output window, operand 0, single buffered']
    %11 = vsyncpa [#allocation5], 0
    %12 = vsyncpa [#allocation7], 0
    %13 = vsyncpa [#allocation4], 0
    // Predicated region
    $region2: #{tpu_custom_call.1} parent=1 // pred_check
      _
    $region3: #{tpu_custom_call.1} parent=1 // pred_check_branch
      %15 = sbr.rel (0) target = $region5
    $region4: #{tpu_custom_call.1} parent=1 // pred_region
      %s17 = ssub.s32 16, 16
      %18 = vsyncadd [#allocation5], %s17
      %s20 = sshll.u32 %s0, 4
      %s21 = int_to_ptr.vmem [resolvable:$true] %s20
      %23 = dma.vmem_to_smem %s21, 16, [#allocation3], [#allocation5]
    $region5: #{tpu_custom_call.1} parent=1 // pred_fallthru
      _
    // Predicated region
    $region6: #{tpu_custom_call.1} parent=1 // pred_check
      _
    $region7: #{tpu_custom_call.1} parent=1 // pred_check_branch
      %25 = sbr.rel (0) target = $region9
    $region8: #{tpu_custom_call.1} parent=1 // pred_region
      %s27 = ssub.s32 16, 16
      %28 = vsyncadd [#allocation7], %s27
      %s30 = sshll.u32 %s1, 4
      %s31 = int_to_ptr.vmem [resolvable:$true] %s30
      %33 = dma.vmem_to_smem %s31, 16, [#allocation6], [#allocation7]
    $region9: #{tpu_custom_call.1} parent=1 // pred_fallthru
      _
    // Predicated region
    $region10: #{tpu_custom_call.1} parent=1 // pred_check
      _
    $region11: #{tpu_custom_call.1} parent=1 // pred_check_branch
      %35 = sbr.rel (0) target = $region13
    $region12: #{tpu_custom_call.1} parent=1 // pred_region
      %s37 = ssub.s32 16, 16
      %38 = vsyncadd [#allocation7], %s37
      %s40 = sshll.u32 %s2, 4
      %s41 = int_to_ptr.vmem [resolvable:$true] %s40
      %43 = dma.vmem_to_smem %s41, 16, [#allocation8], [#allocation7]
    $region13: #{tpu_custom_call.1} parent=1 // pred_fallthru
      _
    // Predicated region
    $region14: #{tpu_custom_call.1} parent=1 // pred_check
      _
    $region15: #{tpu_custom_call.1} parent=1 // pred_check_branch
      %45 = sbr.rel (0) target = $region17
    $region16: #{tpu_custom_call.1} parent=1 // pred_region
      _
    $region17: #{tpu_custom_call.1} parent=1 // pred_fallthru
      _
    // Predicated region
    $region18: #{tpu_custom_call.1} parent=1 // pred_check
      _
    $region19: #{tpu_custom_call.1} parent=1 // pred_check_branch
      %47 = sbr.rel (0) target = $region21
    $region20: #{tpu_custom_call.1} parent=1 // pred_region
      _
    $region21: #{tpu_custom_call.1} parent=1 // pred_fallthru
      _
    // Predicated region
    $region22: #{tpu_custom_call.1} parent=1 // pred_check
      _
    $region23: #{tpu_custom_call.1} parent=1 // pred_check_branch
      %49 = sbr.rel (0) target = $region25
    $region24: #{tpu_custom_call.1} parent=1 // pred_region
      %50 = dma.done [#allocation5], 16
    $region25: #{tpu_custom_call.1} parent=1 // pred_fallthru
      _
    // Predicated region
    $region26: #{tpu_custom_call.1} parent=1 // pred_check
      _
    $region27: #{tpu_custom_call.1} parent=1 // pred_check_branch
      %52 = sbr.rel (0) target = $region29
    $region28: #{tpu_custom_call.1} parent=1 // pred_region
      %53 = dma.done [#allocation7], 16
    $region29: #{tpu_custom_call.1} parent=1 // pred_fallthru
      _
    // Predicated region
    $region30: #{tpu_custom_call.1} parent=1 // pred_check
      _
    $region31: #{tpu_custom_call.1} parent=1 // pred_check_branch
      %55 = sbr.rel (0) target = $region33
    $region32: #{tpu_custom_call.1} parent=1 // pred_region
      %56 = dma.done [#allocation7], 16
    $region33: #{tpu_custom_call.1} parent=1 // pred_fallthru
      _
    %57 = sfence
    %v58 = vld [vmem:[%s4] sm:$0x1]
    %s59 = scalar_lea.vmem %s4, 1
    %v60 = vld [vmem:[%s59] sm:$0x1]
    %s61 = sld [smem:[#allocation3]]
    %v62 = vstv %s61
    %v63 = vmul.f32 %v58, %v62
    %s64 = sld [smem:[#allocation3 + $0x4]]
    %v65 = vstv %s64
    %v66 = vmul.f32 %v60, %v65
    %v67 = vadd.f32 %v63, %v66
    %s68 = sld [smem:[#allocation6]]
    %v69 = vstv %s68
    %v70 = vadd.f32 %v67, %v69
    %v71 = vsub.f32 0.0, %v70
    %v72 = vmul.f32 %v71, 1.442695
    %v73 = vpow.pop %v72
    %v74 = vadd.f32 %v73, 1.0
    %v75 = vrcp.pop %v74
    %s76 = sld [smem:[#allocation8]]
    %v77 = vstv %s76
    %v78 = vmul.f32 %v75, %v77
    %s79 = sld [smem:[#allocation3 + $0x1]]
    %v80 = vstv %s79
    %v81 = vmul.f32 %v58, %v80
    %s82 = sld [smem:[#allocation3 + $0x5]]
    %v83 = vstv %s82
    %v84 = vmul.f32 %v60, %v83
    %v85 = vadd.f32 %v81, %v84
    %s86 = sld [smem:[#allocation6 + $0x1]]
    %v87 = vstv %s86
    %v88 = vadd.f32 %v85, %v87
    %v89 = vsub.f32 0.0, %v88
    %v90 = vmul.f32 %v89, 1.442695
    %v91 = vpow.pop %v90
    %v92 = vadd.f32 %v91, 1.0
    %v93 = vrcp.pop %v92
    %s94 = sld [smem:[#allocation8 + $0x1]]
    %v95 = vstv %s94
    %v96 = vmul.f32 %v93, %v95
    %v97 = vadd.f32 %v78, %v96
    %s98 = sld [smem:[#allocation3 + $0x2]]
    %v99 = vstv %s98
    %v100 = vmul.f32 %v58, %v99
    %s101 = sld [smem:[#allocation3 + $0x6]]
    %v102 = vstv %s101
    %v103 = vmul.f32 %v60, %v102
    %v104 = vadd.f32 %v100, %v103
    %s105 = sld [smem:[#allocation6 + $0x2]]
    %v106 = vstv %s105
    %v107 = vadd.f32 %v104, %v106
    %v108 = vsub.f32 0.0, %v107
    %v109 = vmul.f32 %v108, 1.442695
    %v110 = vpow.pop %v109
    %v111 = vadd.f32 %v110, 1.0
    %v112 = vrcp.pop %v111
    %s113 = sld [smem:[#allocation8 + $0x2]]
    %v114 = vstv %s113
    %v115 = vmul.f32 %v112, %v114
    %v116 = vadd.f32 %v97, %v115
    %s117 = sld [smem:[#allocation3 + $0x3]]
    %v118 = vstv %s117
    %v119 = vmul.f32 %v58, %v118
    %s120 = sld [smem:[#allocation3 + $0x7]]
    %v121 = vstv %s120
    %v122 = vmul.f32 %v60, %v121
    %v123 = vadd.f32 %v119, %v122
    %s124 = sld [smem:[#allocation6 + $0x3]]
    %v125 = vstv %s124
    %v126 = vadd.f32 %v123, %v125
    %v127 = vsub.f32 0.0, %v126
    %v128 = vmul.f32 %v127, 1.442695
    %v129 = vpow.pop %v128
    %v130 = vadd.f32 %v129, 1.0
    %v131 = vrcp.pop %v130
    %s132 = sld [smem:[#allocation8 + $0x3]]
    %v133 = vstv %s132
    %v134 = vmul.f32 %v131, %v133
    %v135 = vadd.f32 %v116, %v134
    %s136 = sld [smem:[#allocation2]]
    %v137 = vstv %s136
    %v138 = vadd.f32 %v135, %v137
    %139 = vst [vmem:[#allocation9] sm:$0x1] %v138
    // Predicated region
    $region34: #{tpu_custom_call.1} parent=1 // pred_check
      _
    $region35: #{tpu_custom_call.1} parent=1 // pred_check_branch
      %141 = sbr.rel (0) target = $region37
    $region36: #{tpu_custom_call.1} parent=1 // pred_region
      %s143 = ssub.s32 16, 16
      %144 = vsyncadd [#allocation4], %s143
      %s146 = sshll.u32 [#allocation9], 4
      %s147 = int_to_ptr.vmem [resolvable:$true] %s146
      %149 = dma.vmem_to_hbm [thread:$0]  %s147, 16, %s5, [#allocation4]
    $region37: #{tpu_custom_call.1} parent=1 // pred_fallthru
      _
    // Predicated region
    $region38: #{tpu_custom_call.1} parent=1 // pred_check
      _
    $region39: #{tpu_custom_call.1} parent=1 // pred_check_branch
      %151 = sbr.rel (0) target = $region41
    $region40: #{tpu_custom_call.1} parent=1 // pred_region
      %152 = dma.done [#allocation4], 16
    $region41: #{tpu_custom_call.1} parent=1 // pred_fallthru
      _
    %153 = vsyncpa [#allocation4], 1
    %154 = vsyncpa [#allocation5], 1
    %155 = vsyncpa [#allocation7], 1

</llo_original>
